<compile_context>
chip_gen: v7x
topology: tpu7x:2x2x1
jax: 0.10.0
libtpu: 0.0.40
codegen_flags: <defaults>
</compile_context>

<pallas_src>
import math
from functools import partial

import numpy as np
import jax
import jax.numpy as jnp
from jax import lax
from jax.experimental import pallas as pl
from jax.experimental.pallas import tpu as pltpu

NUM_CLASSES = 2
DIM_EMB = 10
VOCAB_SIZE = 32

_ROWS, _COLS = 8, 128            # one f32 vreg of uniforms per stream
_TILE = (_ROWS, _COLS)
_OUT_TILE = (_ROWS, 2 * _COLS)   # lane-dense output: [cos branch | sin branch]

# Plain numpy scalars -> inlined as jaxpr literals (NOT captured constants).
_TWO_PI = np.float32(2.0 * math.pi)
_GOLDEN = np.uint32(0x9E3779B9)
_STREAM2 = np.uint32(0x632BE5AB)
_MIX1 = np.uint32(0x7FEB352D)
_MIX2 = np.uint32(0x846CA68B)
_EXP_ONE = np.uint32(0x3F800000)


def _lowbias32(x):
    """32-bit integer finalizer (lowbias32): good avalanche, pure VPU int ops."""
    x = x ^ (x >> 16)
    x = x * _MIX1
    x = x ^ (x >> 15)
    x = x * _MIX2
    x = x ^ (x >> 16)
    return x


def _bits_to_unit_float(bits):
    """uint32 bits -> f32 in [1, 2) via exponent trick (no int->float convert)."""
    mant = (bits >> 9) | _EXP_ONE
    return lax.bitcast_convert_type(mant, jnp.float32)


def _randn_kernel(seed_ref, out_ref):
    # Deterministic, counter-based PRNG: lowers on Mosaic AND in interpret mode.
    seed = seed_ref[0].astype(jnp.uint32)

    row = lax.broadcasted_iota(jnp.int32, _TILE, 0)
    col = lax.broadcasted_iota(jnp.int32, _TILE, 1)
    ctr = (row * _COLS + col).astype(jnp.uint32)

    base = ctr + seed * _GOLDEN
    bits1 = _lowbias32(base)
    bits2 = _lowbias32(base + _STREAM2)

    # u1 in (0, 1]  (log(0) impossible, no biased clamp); u2 in [0, 1).
    u1 = np.float32(2.0) - _bits_to_unit_float(bits1)
    u2 = _bits_to_unit_float(bits2) - np.float32(1.0)

    # Box-Muller, both branches -> (8, 256) standard normals, single store.
    r = jnp.sqrt(np.float32(-2.0) * jnp.log(u1))
    theta = _TWO_PI * u2
    z = jnp.concatenate([r * jnp.cos(theta), r * jnp.sin(theta)], axis=-1)
    out_ref[...] = z


def _pallas_randn_slab(seed_arr):
    """(1,) int32 seed -> (8, 256) f32 slab of N(0, 1) samples."""
    return pl.pallas_call(
        _randn_kernel,
        out_shape=jax.ShapeDtypeStruct(_OUT_TILE, jnp.float32),
        in_specs=[pl.BlockSpec(memory_space=pltpu.MemorySpace.SMEM)],
        out_specs=pl.BlockSpec(memory_space=pltpu.MemorySpace.VMEM),
    )(seed_arr)


@partial(jax.jit, static_argnames=("num_classes",))
def _randn_vector(seed_arr, num_classes):
    slab = _pallas_randn_slab(seed_arr)
    # torch.randn(NUM_CLASSES) -> 1-D vector of length NUM_CLASSES.
    return slab[0, :num_classes]


class FFNN:
    """JAX/Pallas port of the reference PyTorch FFNN module."""

    def __init__(self, X, Y, vocab_size, dim_emb=DIM_EMB, num_classes=NUM_CLASSES):
        self.VOCAB_SIZE = vocab_size
        self.DIM_EMB = dim_emb
        self.NUM_CLASSES = num_classes
        # TODO(synk): reference __init__ declares no weights/layers to port.

    def forward(self, X, train=False, seed=0):
        # X is ignored, exactly as in the reference forward().
        del X, train
        seed_arr = jnp.asarray([seed], dtype=jnp.int32)
        return _randn_vector(seed_arr, self.NUM_CLASSES)

    __call__ = forward


if __name__ == "__main__":
    key = jax.random.PRNGKey(0)
    # Small synthetic "token index" input (seq=8 ids over VOCAB_SIZE); ignored
    # by forward(), matching the reference module.
    x = jax.random.randint(key, (8,), 0, VOCAB_SIZE, dtype=jnp.int32)
    y = jnp.zeros((1,), dtype=jnp.int32)

    model = FFNN(x, y, VOCAB_SIZE, DIM_EMB, NUM_CLASSES)
    out = jax.block_until_ready(model(x, seed=0))

    assert out.shape == (NUM_CLASSES,)
    assert out.dtype == jnp.float32
    assert bool(jnp.all(jnp.isfinite(out)))

    # Determinism: same seed -> same draw; different seed -> different draw.
    out_same = jax.block_until_ready(model(x, seed=0))
    assert bool(jnp.all(out == out_same))
    out_diff = jax.block_until_ready(model(x, seed=1))
    assert not bool(jnp.all(out == out_diff))

    print("KERNEL_OK")
</pallas_src>

<mosaic_0001>
module attributes {stable_mosaic.version = 11 : i64} {
  func.func @_randn_kernel(%arg0: memref<1xi32, #tpu.memory_space<smem>>, %arg1: memref<8x256xf32, #tpu.memory_space<vmem>>) attributes {dimension_semantics = [], scalar_prefetch = 0 : i64, scratch_operands = 0 : i64, tpu.core_type = #tpu.core_type<tc>} {
    %c0 = arith.constant 0 : index
    %0 = memref.load %arg0[%c0] : memref<1xi32, #tpu.memory_space<smem>>
    %1 = tpu.iota {dimensions = array<i32: 0>} : vector<8x128xi32>
    %2 = tpu.iota {dimensions = array<i32: 1>} : vector<8x128xi32>
    %c128_i32 = arith.constant 128 : i32
    %3 = vector.broadcast %c128_i32 : i32 to vector<8x128xi32>
    %4 = arith.muli %1, %3 : vector<8x128xi32>
    %5 = arith.addi %4, %2 : vector<8x128xi32>
    %c-1640531527_i32 = arith.constant -1640531527 : i32
    %6 = arith.muli %0, %c-1640531527_i32 : i32
    %7 = vector.broadcast %6 : i32 to vector<8x128xi32>
    %8 = arith.addi %5, %7 : vector<8x128xi32>
    %c16_i32 = arith.constant 16 : i32
    %9 = vector.broadcast %c16_i32 : i32 to vector<8x128xi32>
    %10 = arith.shrui %8, %9 : vector<8x128xi32>
    %11 = arith.xori %8, %10 : vector<8x128xi32>
    %c2146121005_i32 = arith.constant 2146121005 : i32
    %12 = vector.broadcast %c2146121005_i32 : i32 to vector<8x128xi32>
    %13 = arith.muli %11, %12 : vector<8x128xi32>
    %c15_i32 = arith.constant 15 : i32
    %14 = vector.broadcast %c15_i32 : i32 to vector<8x128xi32>
    %15 = arith.shrui %13, %14 : vector<8x128xi32>
    %16 = arith.xori %13, %15 : vector<8x128xi32>
    %c-2073254261_i32 = arith.constant -2073254261 : i32
    %17 = vector.broadcast %c-2073254261_i32 : i32 to vector<8x128xi32>
    %18 = arith.muli %16, %17 : vector<8x128xi32>
    %c16_i32_0 = arith.constant 16 : i32
    %19 = vector.broadcast %c16_i32_0 : i32 to vector<8x128xi32>
    %20 = arith.shrui %18, %19 : vector<8x128xi32>
    %21 = arith.xori %18, %20 : vector<8x128xi32>
    %c1663821227_i32 = arith.constant 1663821227 : i32
    %22 = vector.broadcast %c1663821227_i32 : i32 to vector<8x128xi32>
    %23 = arith.addi %8, %22 : vector<8x128xi32>
    %c16_i32_1 = arith.constant 16 : i32
    %24 = vector.broadcast %c16_i32_1 : i32 to vector<8x128xi32>
    %25 = arith.shrui %23, %24 : vector<8x128xi32>
    %26 = arith.xori %23, %25 : vector<8x128xi32>
    %c2146121005_i32_2 = arith.constant 2146121005 : i32
    %27 = vector.broadcast %c2146121005_i32_2 : i32 to vector<8x128xi32>
    %28 = arith.muli %26, %27 : vector<8x128xi32>
    %c15_i32_3 = arith.constant 15 : i32
    %29 = vector.broadcast %c15_i32_3 : i32 to vector<8x128xi32>
    %30 = arith.shrui %28, %29 : vector<8x128xi32>
    %31 = arith.xori %28, %30 : vector<8x128xi32>
    %c-2073254261_i32_4 = arith.constant -2073254261 : i32
    %32 = vector.broadcast %c-2073254261_i32_4 : i32 to vector<8x128xi32>
    %33 = arith.muli %31, %32 : vector<8x128xi32>
    %c16_i32_5 = arith.constant 16 : i32
    %34 = vector.broadcast %c16_i32_5 : i32 to vector<8x128xi32>
    %35 = arith.shrui %33, %34 : vector<8x128xi32>
    %36 = arith.xori %33, %35 : vector<8x128xi32>
    %c9_i32 = arith.constant 9 : i32
    %37 = vector.broadcast %c9_i32 : i32 to vector<8x128xi32>
    %38 = arith.shrui %21, %37 : vector<8x128xi32>
    %c1065353216_i32 = arith.constant 1065353216 : i32
    %39 = vector.broadcast %c1065353216_i32 : i32 to vector<8x128xi32>
    %40 = arith.ori %38, %39 : vector<8x128xi32>
    %41 = tpu.bitcast %40 : vector<8x128xi32> -> vector<8x128xf32>
    %cst = arith.constant 2.000000e+00 : f32
    %42 = vector.broadcast %cst : f32 to vector<8x128xf32>
    %43 = arith.subf %42, %41 : vector<8x128xf32>
    %c9_i32_6 = arith.constant 9 : i32
    %44 = vector.broadcast %c9_i32_6 : i32 to vector<8x128xi32>
    %45 = arith.shrui %36, %44 : vector<8x128xi32>
    %c1065353216_i32_7 = arith.constant 1065353216 : i32
    %46 = vector.broadcast %c1065353216_i32_7 : i32 to vector<8x128xi32>
    %47 = arith.ori %45, %46 : vector<8x128xi32>
    %48 = tpu.bitcast %47 : vector<8x128xi32> -> vector<8x128xf32>
    %cst_8 = arith.constant 1.000000e+00 : f32
    %49 = vector.broadcast %cst_8 : f32 to vector<8x128xf32>
    %50 = arith.subf %48, %49 : vector<8x128xf32>
    %51 = math.log %43 : vector<8x128xf32>
    %cst_9 = arith.constant -2.000000e+00 : f32
    %52 = vector.broadcast %cst_9 : f32 to vector<8x128xf32>
    %53 = arith.mulf %52, %51 : vector<8x128xf32>
    %54 = math.sqrt %53 : vector<8x128xf32>
    %cst_10 = arith.constant 6.28318548 : f32
    %55 = vector.broadcast %cst_10 : f32 to vector<8x128xf32>
    %56 = arith.mulf %55, %50 : vector<8x128xf32>
    %57 = math.cos %56 : vector<8x128xf32>
    %58 = arith.mulf %54, %57 : vector<8x128xf32>
    %59 = math.sin %56 : vector<8x128xf32>
    %60 = arith.mulf %54, %59 : vector<8x128xf32>
    %61 = tpu.concatenate %58, %60 in 1 : vector<8x128xf32>, vector<8x128xf32> -> vector<8x256xf32>
    %c0_11 = arith.constant 0 : index
    %c0_12 = arith.constant 0 : index
    %62 = vector.load %arg1[%c0_11, %c0_12] : memref<8x256xf32, #tpu.memory_space<vmem>>, vector<8x256xf32>
    tpu.vector_store %arg1[%c0_11, %c0_12], %61 {strides = array<i32>} : memref<8x256xf32, #tpu.memory_space<vmem>>, vector<8x256xf32>,
    return
  }
}

</mosaic_0001>

<llo_original>
// kernel: _randn_vector.1
$region0: #{_randn_vector.1}
  #allocation0 [shape = 'u32[]', space=smem, size = 0x4, offset = 0x4, fixed_abs, tag = 'smem constant byte address 0x4 - core index']
  #allocation1 [shape = 'u32[144,128]{1,0:T(1,128)}', space=vmem, size = 0x12000, scoped, tag = 'internal scratch']
  #allocation2 [shape = 's32[1]{0:T(128)S(6)}', space=smem, size = 0x200, scoped, tag = 'scoped memory for _randn_vector.1']
  %s0 = inlined_call_operand.<no memory space> [shape: s32[1], index: 0, kind: input, shape index: {}]
  %s1 = inlined_call_operand.vmem [shape: f32[8,256], index: 1, kind: output, shape index: {}]
  %s2 = sld [smem:[#allocation0]]
  $region14: #{_randn_vector.1} parent=0
    _
  %s4 = ssub.s32 1, %s2
  %s5 = scalar_select 0, %s4, %s2
  %6 = sst [smem:[#allocation2]] %s0
  // Predicated region
  $region2: #{_randn_vector.1} parent=0 // pred_check
    _
  $region3: #{_randn_vector.1} parent=0 // pred_check_branch
    %8 = sbr.rel (0) target = $region5
  $region4: #{_randn_vector.1} parent=0 // pred_region
    _
  $region5: #{_randn_vector.1} parent=0 // pred_fallthru
    _
  %s9 = sld [smem:[#allocation2]]
  %v10 = vlaneseq
  %v11 = vshrl.u32 %v10, 7
  %v12 = vlaneseq
  %v13 = vand.u32 %v12, 127
  %v14 = vmul.u32 %v11, 128
  %v15 = vadd.s32 %v14, %v13
  %s16 = smul.u32 %s9, 2654435769
  %v17 = vstv %s16
  %v18 = vadd.s32 %v15, %v17
  %v19 = vshrl.u32 %v18, 16
  %v20 = vxor.u32 %v18, %v19
  %v21 = vmul.u32 %v20, 2146121005
  %v22 = vshrl.u32 %v21, 15
  %v23 = vxor.u32 %v21, %v22
  %v24 = vmul.u32 %v23, 2221713035
  %v25 = vshrl.u32 %v24, 16
  %v26 = vxor.u32 %v24, %v25
  %v27 = vadd.s32 %v18, 1663821227
  %v28 = vshrl.u32 %v27, 16
  %v29 = vxor.u32 %v27, %v28
  %v30 = vmul.u32 %v29, 2146121005
  %v31 = vshrl.u32 %v30, 15
  %v32 = vxor.u32 %v30, %v31
  %v33 = vmul.u32 %v32, 2221713035
  %v34 = vshrl.u32 %v33, 16
  %v35 = vxor.u32 %v33, %v34
  %v36 = vshrl.u32 %v26, 9
  %v37 = vor.u32 %v36, 1065353216
  %v39 = vsub.f32 2.0, %v37
  %v40 = vshrl.u32 %v35, 9
  %v41 = vor.u32 %v40, 1065353216
  %v43 = vsub.f32 %v41, 1.0
  %v44 = vlog2.pop %v39
  %v45 = vmul.f32 %v44, 0.6931472
  %v46 = vmul.f32 %v45, -2.0
  %v47 = vrsqrt.pop %v46
  %v48 = vmul.f32 %v46, %v47
  %vm49 = vcmp.eq.f32.partialorder %v46, inf
  %v50 = vsel %vm49, %v46, %v48
  %vm51 = vcmp.eq.f32.partialorder %v46, 0.0
  %v52 = vand.u32 %v46, 2147483648
  %v53 = vsel %vm51, %v52, %v50
  %v54 = vmul.f32 %v43, 6.2831855
  %v55 = vand.u32 2147483647, %v54
  %vm56 = vcmp.le.f32.partialorder %v55, 0.7853982
  %vm57 = vcmp.lt.s32.totalorder %v54, 0
  %v58 = vand.u32 %v54, 2139095040
  %v59 = vshrl.u32 %v58, 23
  %v60 = vsub.s32 %v59, 127
  %v61 = vand.u32 2147483647, %v54
  %v62 = vand.u32 %v61, 8388607
  %v63 = vor.u32 %v62, 8388608
  %v64 = vsub.s32 0, %v63
  %v65 = vadd.s32 %v60, 1
  %vm66 = vcmp.gt.s32.totalorder %v65, 0
  %v67 = vsel %vm66, %v65, 0
  %v68 = vshrl.u32 %v67, 5
  %v69 = vand.u32 %v67, 31
  %v70 = vsub.s32 32, %v69
  %v71 = vshrl.u32 683565275, %v70
  %v72 = vshll.u32 683565275, %v69
  %v73 = vshrl.u32 2475754826, %v70
  %v74 = vor.u32 %v72, %v73
  %v75 = vshll.u32 2475754826, %v69
  %v76 = vshrl.u32 2131351028, %v70
  %v77 = vor.u32 %v75, %v76
  %v78 = vshll.u32 2131351028, %v69
  %v79 = vshrl.u32 2102212464, %v70
  %v80 = vor.u32 %v78, %v79
  %v81 = vshll.u32 2102212464, %v69
  %v82 = vshrl.u32 920167782, %v70
  %v83 = vor.u32 %v81, %v82
  %v84 = vshll.u32 920167782, %v69
  %v85 = vshrl.u32 1326507024, %v70
  %v86 = vor.u32 %v84, %v85
  %vm87 = vcmp.lt.s32.totalorder %v68, 1
  %vm88 = vcmp.lt.s32.totalorder %v68, 2
  %vm89 = vcmp.lt.s32.totalorder %v68, 3
  %vm90 = vcmp.lt.s32.totalorder %v68, 4
  %v91 = vsel %vm87, %v71, %v74
  %v92 = vsel %vm90, %v80, 2102212464
  %v93 = vsel %vm89, %v77, %v92
  %v94 = vsel %vm88, %v91, %v93
  %v95 = vsel %vm87, %v74, %v77
  %v96 = vsel %vm90, %v83, 920167782
  %v97 = vsel %vm89, %v80, %v96
  %v98 = vsel %vm88, %v95, %v97
  %v99 = vsel %vm87, %v77, %v80
  %v100 = vsel %vm90, %v86, 1326507024
  %v101 = vsel %vm89, %v83, %v100
  %v102 = vsel %vm88, %v99, %v101
  %v103 = vshll.u32 %v63, 8
  %v104 = vmul.u32.u64.compose %v103, %v102
  %v105 = vextract.low.u32 %v104
  %v106 = vextract.high.u32 %v104
  %v107 = vmul.u32.u64.compose %v103, %v98
  %v108 = vextract.low.u32 %v107
  %v109 = vextract.high.u32 %v107
  %v110 = vmul.u32 %v103, %v94
  %v111 = vadd.s32 %v106, %v108
  %vm112 = vc.u32 %v106, %v108
  %v113 = vadd.s32 %v109, 1
  %v114 = vsel %vm112, %v113, %v109
  %v115 = vadd.s32 %v110, %v114
  %v116 = vadd.s32 %v115, 536870912
  %v117 = vshrl.u32 %v116, 30
  %v118 = vshll.u32 %v117, 30
  %v119 = vsub.s32 %v115, %v118
  %vm120 = vcmp.lt.s32.totalorder %v119, 0
  %v121 = vsub.s32 0, %v119
  %v122 = vsel %vm120, %v121, %v119
  %v123 = vclz %v122
  %v124 = vsub.s32 %v123, 2
  %vm125 = vcmp.gt.s32.totalorder 0, %v124
  %v126 = vsel %vm125, 0, %v124
  %v127 = vsub.s32 32, %v126
  %v128 = vshll.u32 %v119, %v126
  %v129 = vshrl.u32 %v111, %v127
  %v130 = vor.u32 %v128, %v129
  %v131 = vsub.s32 4294967266, %v126
  %v132 = vadd.s32 %v131, 127
  %v133 = vshll.u32 %v132, 23
  %v134 = vor.u32 4788187, %v133
  %v135 = vand.u32 2147483647, %v134
  %v137 = vcvt.s32.f32 %v130
  %v138 = vmul.f32 %v137, %v135
  %v139 = vxor.u32 %v138, 2147483648
  %v140 = vsel %vm57, %v139, %v138
  %v141 = vsub.s32 4, %v117
  %v142 = vsel %vm57, %v141, %v117
  %v143 = vsel %vm56, %v54, %v140
  %v144 = vsel %vm56, 0, %v142
  %v145 = vcosq.f32.pop %v143
  %v146 = vsinq.f32.pop %v143
  %vm147 = vweird.f32 %v54
  %v148 = vand.u32 %v144, 3
  %vm149 = vcmp.lt.s32.totalorder %v148, 2
  %vm150 = vcmp.eq.s32.totalorder %v148, 0
  %v151 = vxor.u32 %v146, 2147483648
  %v152 = vsel %vm150, %v145, %v151
  %vm153 = vcmp.eq.s32.totalorder %v148, 2
  %v154 = vxor.u32 %v145, 2147483648
  %v155 = vsel %vm153, %v154, %v146
  %v156 = vsel %vm149, %v152, %v155
  %v157 = vsel %vm147, nan, %v156
  %v158 = vmul.f32 %v53, %v157
  %v159 = vand.u32 2147483647, %v54
  %vm160 = vcmp.le.f32.partialorder %v159, 0.7853982
  %vm161 = vcmp.lt.s32.totalorder %v54, 0
  %v162 = vand.u32 %v54, 2139095040
  %v163 = vshrl.u32 %v162, 23
  %v164 = vsub.s32 %v163, 127
  %v165 = vand.u32 2147483647, %v54
  %v166 = vand.u32 %v165, 8388607
  %v167 = vor.u32 %v166, 8388608
  %v168 = vsub.s32 0, %v167
  %v169 = vadd.s32 %v164, 1
  %vm170 = vcmp.gt.s32.totalorder %v169, 0
  %v171 = vsel %vm170, %v169, 0
  %v172 = vshrl.u32 %v171, 5
  %v173 = vand.u32 %v171, 31
  %v174 = vsub.s32 32, %v173
  %v175 = vshrl.u32 683565275, %v174
  %v176 = vshll.u32 683565275, %v173
  %v177 = vshrl.u32 2475754826, %v174
  %v178 = vor.u32 %v176, %v177
  %v179 = vshll.u32 2475754826, %v173
  %v180 = vshrl.u32 2131351028, %v174
  %v181 = vor.u32 %v179, %v180
  %v182 = vshll.u32 2131351028, %v173
  %v183 = vshrl.u32 2102212464, %v174
  %v184 = vor.u32 %v182, %v183
  %v185 = vshll.u32 2102212464, %v173
  %v186 = vshrl.u32 920167782, %v174
  %v187 = vor.u32 %v185, %v186
  %v188 = vshll.u32 920167782, %v173
  %v189 = vshrl.u32 1326507024, %v174
  %v190 = vor.u32 %v188, %v189
  %vm191 = vcmp.lt.s32.totalorder %v172, 1
  %vm192 = vcmp.lt.s32.totalorder %v172, 2
  %vm193 = vcmp.lt.s32.totalorder %v172, 3
  %vm194 = vcmp.lt.s32.totalorder %v172, 4
  %v195 = vsel %vm191, %v175, %v178
  %v196 = vsel %vm194, %v184, 2102212464
  %v197 = vsel %vm193, %v181, %v196
  %v198 = vsel %vm192, %v195, %v197
  %v199 = vsel %vm191, %v178, %v181
  %v200 = vsel %vm194, %v187, 920167782
  %v201 = vsel %vm193, %v184, %v200
  %v202 = vsel %vm192, %v199, %v201
  %v203 = vsel %vm191, %v181, %v184
  %v204 = vsel %vm194, %v190, 1326507024
  %v205 = vsel %vm193, %v187, %v204
  %v206 = vsel %vm192, %v203, %v205
  %v207 = vshll.u32 %v167, 8
  %v208 = vmul.u32.u64.compose %v207, %v206
  %v209 = vextract.low.u32 %v208
  %v210 = vextract.high.u32 %v208
  %v211 = vmul.u32.u64.compose %v207, %v202
  %v212 = vextract.low.u32 %v211
  %v213 = vextract.high.u32 %v211
  %v214 = vmul.u32 %v207, %v198
  %v215 = vadd.s32 %v210, %v212
  %vm216 = vc.u32 %v210, %v212
  %v217 = vadd.s32 %v213, 1
  %v218 = vsel %vm216, %v217, %v213
  %v219 = vadd.s32 %v214, %v218
  %v220 = vadd.s32 %v219, 536870912
  %v221 = vshrl.u32 %v220, 30
  %v222 = vshll.u32 %v221, 30
  %v223 = vsub.s32 %v219, %v222
  %vm224 = vcmp.lt.s32.totalorder %v223, 0
  %v225 = vsub.s32 0, %v223
  %v226 = vsel %vm224, %v225, %v223
  %v227 = vclz %v226
  %v228 = vsub.s32 %v227, 2
  %vm229 = vcmp.gt.s32.totalorder 0, %v228
  %v230 = vsel %vm229, 0, %v228
  %v231 = vsub.s32 32, %v230
  %v232 = vshll.u32 %v223, %v230
  %v233 = vshrl.u32 %v215, %v231
  %v234 = vor.u32 %v232, %v233
  %v235 = vsub.s32 4294967266, %v230
  %v236 = vadd.s32 %v235, 127
  %v237 = vshll.u32 %v236, 23
  %v238 = vor.u32 4788187, %v237
  %v239 = vand.u32 2147483647, %v238
  %v241 = vcvt.s32.f32 %v234
  %v242 = vmul.f32 %v241, %v239
  %v243 = vxor.u32 %v242, 2147483648
  %v244 = vsel %vm161, %v243, %v242
  %v245 = vsub.s32 4, %v221
  %v246 = vsel %vm161, %v245, %v221
  %v247 = vsel %vm160, %v54, %v244
  %v248 = vsel %vm160, 0, %v246
  %v249 = vcosq.f32.pop %v247
  %v250 = vsinq.f32.pop %v247
  %vm251 = vweird.f32 %v54
  %v252 = vadd.s32 %v248, 3
  %v253 = vand.u32 %v252, 3
  %vm254 = vcmp.lt.s32.totalorder %v253, 2
  %vm255 = vcmp.eq.s32.totalorder %v253, 0
  %v256 = vxor.u32 %v250, 2147483648
  %v257 = vsel %vm255, %v249, %v256
  %vm258 = vcmp.eq.s32.totalorder %v253, 2
  %v259 = vxor.u32 %v249, 2147483648
  %v260 = vsel %vm258, %v259, %v250
  %v261 = vsel %vm254, %v257, %v260
  %v262 = vsel %vm251, nan, %v261
  %v263 = vmul.f32 %v53, %v262
  %264 = vst [vmem:[%s1] sm:$0xff] %v158
  %265 = vst [vmem:[%s1 + $0x8] sm:$0xff] %v263
  // Predicated region
  $region6: #{_randn_vector.1} parent=0 // pred_check
    _
  $region7: #{_randn_vector.1} parent=0 // pred_check_branch
    %267 = sbr.rel (0) target = $region9
  $region8: #{_randn_vector.1} parent=0 // pred_region
    _
  $region9: #{_randn_vector.1} parent=0 // pred_fallthru
    _
  // Predicated region
  $region10: #{_randn_vector.1} parent=0 // pred_check
    _
  $region11: #{_randn_vector.1} parent=0 // pred_check_branch
    %269 = sbr.rel (0) target = $region13
  $region12: #{_randn_vector.1} parent=0 // pred_region
    _
  $region13: #{_randn_vector.1} parent=0 // pred_fallthru
    _

</llo_original>
